<compile_context>
chip_gen: v7x
topology: tpu7x:2x2x1
jax: 0.10.0
libtpu: 0.0.40
codegen_flags: <defaults>
</compile_context>

<pallas_src>
import jax
import jax.numpy as jnp
from jax.experimental import pallas as pl
from jax.experimental.pallas import tpu as pltpu


def _add_edge_kernel(hv_ref, w_ref, b_ref, out_ref):
    """One AddEdge decision per grid step.

    hv_ref : (1, N, H) VMEM   node features of this graph
    w_ref  : (8, H)    VMEM   row 0 = wg (node gating), row 1 = wne (folded
                              node_to_graph @ weg), row 2 = wes (src slice of
                              the add_edge weight); rows 3..7 zero padding.
    b_ref  : (3,)      SMEM   [bg, bne, be]
    out_ref: (1, 1, 128) VMEM lanes 0..3 = [logit, prob, logp0, logp1]
    """
    hv = hv_ref[0]                      # (N, H)
    n = hv.shape[0]

    w = w_ref[...]                      # (8, H)
    wg = w[0:1, :]                      # (1, H)
    wne = w[1:2, :]                     # (1, H)
    wes = w[2:3, :]                     # (1, H)

    bg = b_ref[0]
    bne = b_ref[1]
    be = b_ref[2]

    # GraphEmbed gate (VPU mul + lane reduce; no MXU for a 1-column result).
    gate = jax.nn.sigmoid(jnp.sum(hv * wg, axis=-1, keepdims=True) + bg)     # (N, 1)
    # Folded node_to_graph @ weg contribution per node.
    h_ne = jnp.sum(hv * wne, axis=-1, keepdims=True) + bne                   # (N, 1)
    graph_term = jnp.sum(gate * h_ne, axis=0, keepdims=True)                 # (1, 1)

    # src embed = last node's hv; its slice of the add_edge linear.
    src = hv[n - 1:n, :]                                                     # (1, H)
    src_term = jnp.sum(src * wes, axis=-1, keepdims=True)                    # (1, 1)

    logit = graph_term + src_term + be                                       # (1, 1)

    # Pack the four scalars lane-dense into one (1, 128) vector.
    logit_b = jnp.broadcast_to(logit, (1, 128))
    lane = jax.lax.broadcasted_iota(jnp.int32, (1, 128), 1)
    out = jnp.where(lane == 0, logit_b,
          jnp.where(lane == 1, jax.nn.sigmoid(logit_b),
          jnp.where(lane == 2, jax.nn.log_sigmoid(-logit_b),
                               jax.nn.log_sigmoid(logit_b))))
    out_ref[0] = out


def add_edge_pallas(hv_batch, w_slab, biases):
    """Batched fused AddEdge head.

    hv_batch : (B, N, H) f32 — B graphs, each with N nodes (same N per graph).
    Returns   (B, 1, 128) f32; lanes 0..3 = [logit, prob, logp0, logp1].
    """
    B, N, H = hv_batch.shape
    return pl.pallas_call(
        _add_edge_kernel,
        out_shape=jax.ShapeDtypeStruct((B, 1, 128), jnp.float32),
        grid=(B,),
        in_specs=[
            pl.BlockSpec((1, N, H), lambda b: (b, 0, 0)),
            pl.BlockSpec((8, H), lambda b: (0, 0)),
            pl.BlockSpec(memory_space=pltpu.MemorySpace.SMEM),
        ],
        out_specs=pl.BlockSpec((1, 1, 128), lambda b: (b, 0, 0)),
        compiler_params=pltpu.CompilerParams(
            dimension_semantics=("parallel",)),   # both TCs on v7x for B > 1
    )(hv_batch, w_slab, biases)


def preprocess_params(params):
    """One-time host-side fold + pack (cache the result; params are fixed per step).

    Fold:  graph_embed @ weg == sum_n gate_n * (hv_n @ (wn @ weg) + bn @ weg)
    Pack:  (8, H) weight slab + (3,) SMEM bias vector.
    """
    wg, bg, wn, bn, weg, wes, be = params
    h = wg.shape[0]
    wne = wn @ weg                       # (H, 1)
    bne = bn @ weg                       # (1, 1)
    w_slab = jnp.zeros((8, h), jnp.float32)
    w_slab = w_slab.at[0, :].set(wg[:, 0])
    w_slab = w_slab.at[1, :].set(wne[:, 0])
    w_slab = w_slab.at[2, :].set(wes[:, 0])
    biases = jnp.stack([bg[0, 0], bne[0, 0], be[0, 0]]).astype(jnp.float32)
    return w_slab, biases


def add_edge_forward(hv, prep, action=None, training=True, rng=None):
    """Mirror of AddEdge.forward for a single graph (B=1 batched call)."""
    w_slab, biases = prep
    out = add_edge_pallas(hv[None], w_slab, biases)[0, 0]   # (128,)
    logit, prob, logp0, logp1 = out[0], out[1], out[2], out[3]
    if not training:
        assert rng is not None
        # Sample on device; defer host .item()/bool() syncs to the rollout end
        # where possible — a per-step sync costs far more than this kernel.
        action = int(jax.random.bernoulli(rng, prob))
    to_add_edge = bool(action == 0)
    sample_log_prob = None
    if training:
        sample_log_prob = logp0 if action == 0 else logp1
    return to_add_edge, sample_log_prob, logit, prob


def init_params(key, node_hidden_size):
    """Deterministic init mimicking nn.Linear defaults (uniform +-1/sqrt(fan_in))."""
    gh = 2 * node_hidden_size
    h = node_hidden_size
    ks = jax.random.split(key, 7)

    def u(k, shape, fan_in):
        bound = 1.0 / jnp.sqrt(fan_in)
        return jax.random.uniform(k, shape, jnp.float32, -bound, bound)

    wg = u(ks[0], (h, 1), h)            # node_gating: Linear(H, 1)
    bg = u(ks[1], (1, 1), h)
    wn = u(ks[2], (h, gh), h)           # node_to_graph: Linear(H, 2H)
    bn = u(ks[3], (1, gh), h)
    we = u(ks[4], (gh + h, 1), gh + h)  # add_edge: Linear(2H + H, 1)
    be = u(ks[5], (1, 1), gh + h)
    weg, wes = we[:gh], we[gh:]
    return (wg, bg, wn, bn, weg, wes, be)


def _reference(hv, params):
    """Pure-JAX reference of the original (unfolded) forward pass."""
    wg, bg, wn, bn, weg, wes, be = params
    gate = jax.nn.sigmoid(hv @ wg + bg)
    graph_embed = jnp.sum(gate * (hv @ wn + bn), axis=0, keepdims=True)
    src = hv[-1:]
    logit = graph_embed @ weg + src @ wes + be
    return logit, jax.nn.sigmoid(logit), jax.nn.log_sigmoid(-logit), jax.nn.log_sigmoid(logit)


if __name__ == "__main__":
    node_hidden_size = 16
    num_nodes = 8

    key = jax.random.PRNGKey(0)
    k_hv, k_params, k_batch = jax.random.split(key, 3)

    hv = jax.random.normal(k_hv, (num_nodes, node_hidden_size), jnp.float32)
    params = init_params(k_params, node_hidden_size)
    prep = preprocess_params(params)   # cached fold + pack (done once)

    # --- single decision, training path with a fixed action (as in the module) ---
    to_add_edge, sample_log_prob, logit, prob = add_edge_forward(
        hv, prep, action=1, training=True)
    jax.block_until_ready((logit, prob, sample_log_prob))

    ref_logit, ref_prob, ref_lp0, ref_lp1 = _reference(hv, params)
    assert jnp.allclose(logit, ref_logit[0, 0], atol=1e-4, rtol=1e-4)
    assert jnp.allclose(prob, ref_prob[0, 0], atol=1e-4, rtol=1e-4)
    assert jnp.allclose(sample_log_prob, ref_lp1[0, 0], atol=1e-4, rtol=1e-4)
    assert to_add_edge is False  # action == 1 -> do not stop adding edges

    # --- batched decisions: amortize per-call overhead, parallel grid on v7x ---
    # TODO(synk): batching assumes equal node count per graph; ragged graphs
    # would need padding + a per-graph node-count scalar (SMEM) for masking.
    B = 4
    hv_batch = jax.random.normal(
        k_batch, (B, num_nodes, node_hidden_size), jnp.float32)
    out_b = add_edge_pallas(hv_batch, *prep)   # (B, 1, 128)
    jax.block_until_ready(out_b)
    for b in range(B):
        rl, rp, r0, r1 = _reference(hv_batch[b], params)
        assert jnp.allclose(out_b[b, 0, 0], rl[0, 0], atol=1e-4, rtol=1e-4)
        assert jnp.allclose(out_b[b, 0, 1], rp[0, 0], atol=1e-4, rtol=1e-4)
        assert jnp.allclose(out_b[b, 0, 2], r0[0, 0], atol=1e-4, rtol=1e-4)
        assert jnp.allclose(out_b[b, 0, 3], r1[0, 0], atol=1e-4, rtol=1e-4)

    print("KERNEL_OK")
</pallas_src>

<mosaic_0001>
module attributes {stable_mosaic.version = 11 : i64} {
  func.func @_add_edge_kernel(%arg0: i32, %arg1: memref<1x8x16xf32, #tpu.memory_space<vmem>>, %arg2: memref<8x16xf32, #tpu.memory_space<vmem>>, %arg3: memref<3xf32, #tpu.memory_space<smem>>, %arg4: memref<1x1x128xf32, #tpu.memory_space<vmem>>) attributes {dimension_semantics = [#tpu.dimension_semantics<parallel>], iteration_bounds = array<i64: 1>, scalar_prefetch = 0 : i64, scratch_operands = 0 : i64, tpu.core_type = #tpu.core_type<tc>, window_params = [{transform_indices = @transform_0, window_bounds = array<i64: 1, 8, 16>}, {pipeline_mode = #tpu.pipeline_mode<synchronous>, transform_indices = @transform_1, window_bounds = array<i64: 8, 16>}, {transform_indices = @transform_2, window_bounds = array<i64: 3>}, {transform_indices = @transform_3, window_bounds = array<i64: 1, 1, 128>}]} {
    %c0 = arith.constant 0 : index
    %c0_0 = arith.constant 0 : index
    %c0_1 = arith.constant 0 : index
    %0 = vector.load %arg1[%c0, %c0_0, %c0_1] : memref<1x8x16xf32, #tpu.memory_space<vmem>>, vector<1x8x16xf32>
    %1 = vector.shape_cast %0 : vector<1x8x16xf32> to vector<8x16xf32>
    %c0_2 = arith.constant 0 : index
    %c0_3 = arith.constant 0 : index
    %2 = vector.load %arg2[%c0_2, %c0_3] : memref<8x16xf32, #tpu.memory_space<vmem>>, vector<8x16xf32>
    %3 = vector.extract_strided_slice %2 {offsets = [0, 0], sizes = [1, 16], strides = [1, 1]} : vector<8x16xf32> to vector<1x16xf32>
    %4 = vector.extract_strided_slice %2 {offsets = [1, 0], sizes = [1, 16], strides = [1, 1]} : vector<8x16xf32> to vector<1x16xf32>
    %5 = vector.extract_strided_slice %2 {offsets = [2, 0], sizes = [1, 16], strides = [1, 1]} : vector<8x16xf32> to vector<1x16xf32>
    %c0_4 = arith.constant 0 : index
    %6 = memref.load %arg3[%c0_4] : memref<3xf32, #tpu.memory_space<smem>>
    %c1 = arith.constant 1 : index
    %7 = memref.load %arg3[%c1] : memref<3xf32, #tpu.memory_space<smem>>
    %c2 = arith.constant 2 : index
    %8 = memref.load %arg3[%c2] : memref<3xf32, #tpu.memory_space<smem>>
    %9 = vector.broadcast %3 : vector<1x16xf32> to vector<8x16xf32>
    %10 = arith.mulf %1, %9 : vector<8x16xf32>
    %cst = arith.constant dense<0.000000e+00> : vector<8xf32>
    %11 = vector.multi_reduction <add>, %10, %cst [1] : vector<8x16xf32> to vector<8xf32>
    %12 = vector.shape_cast %11 : vector<8xf32> to vector<8x1xf32>
    %13 = vector.broadcast %6 : f32 to vector<8x1xf32>
    %14 = arith.addf %12, %13 : vector<8x1xf32>
    %15 = arith.negf %14 : vector<8x1xf32>
    %16 = math.exp %15 : vector<8x1xf32>
    %cst_5 = arith.constant 1.000000e+00 : f32
    %17 = vector.broadcast %cst_5 : f32 to vector<8x1xf32>
    %18 = arith.addf %17, %16 : vector<8x1xf32>
    %19 = arith.divf %17, %18 : vector<8x1xf32>
    %20 = vector.broadcast %4 : vector<1x16xf32> to vector<8x16xf32>
    %21 = arith.mulf %1, %20 : vector<8x16xf32>
    %cst_6 = arith.constant dense<0.000000e+00> : vector<8xf32>
    %22 = vector.multi_reduction <add>, %21, %cst_6 [1] : vector<8x16xf32> to vector<8xf32>
    %23 = vector.shape_cast %22 : vector<8xf32> to vector<8x1xf32>
    %24 = vector.broadcast %7 : f32 to vector<8x1xf32>
    %25 = arith.addf %23, %24 : vector<8x1xf32>
    %26 = arith.mulf %19, %25 : vector<8x1xf32>
    %cst_7 = arith.constant dense<0.000000e+00> : vector<1xf32>
    %27 = vector.multi_reduction <add>, %26, %cst_7 [0] : vector<8x1xf32> to vector<1xf32>
    %28 = vector.shape_cast %27 : vector<1xf32> to vector<1x1xf32>
    %29 = vector.extract_strided_slice %1 {offsets = [7, 0], sizes = [1, 16], strides = [1, 1]} : vector<8x16xf32> to vector<1x16xf32>
    %30 = arith.mulf %29, %5 : vector<1x16xf32>
    %cst_8 = arith.constant dense<0.000000e+00> : vector<1xf32>
    %31 = vector.multi_reduction <add>, %30, %cst_8 [1] : vector<1x16xf32> to vector<1xf32>
    %32 = vector.shape_cast %31 : vector<1xf32> to vector<1x1xf32>
    %33 = arith.addf %28, %32 : vector<1x1xf32>
    %34 = vector.broadcast %8 : f32 to vector<1x1xf32>
    %35 = arith.addf %33, %34 : vector<1x1xf32>
    %36 = vector.shape_cast %35 : vector<1x1xf32> to vector<1x1xf32>
    %37 = vector.broadcast %36 : vector<1x1xf32> to vector<1x128xf32>
    %38 = tpu.iota {dimensions = array<i32: 1>} : vector<1x128xi32>
    %c0_i32 = arith.constant 0 : i32
    %39 = vector.broadcast %c0_i32 : i32 to vector<1x128xi32>
    %40 = arith.cmpi eq, %38, %39 : vector<1x128xi32>
    %c1_i32 = arith.constant 1 : i32
    %41 = vector.broadcast %c1_i32 : i32 to vector<1x128xi32>
    %42 = arith.cmpi eq, %38, %41 : vector<1x128xi32>
    %43 = arith.negf %37 : vector<1x128xf32>
    %44 = math.exp %43 : vector<1x128xf32>
    %cst_9 = arith.constant 1.000000e+00 : f32
    %45 = vector.broadcast %cst_9 : f32 to vector<1x128xf32>
    %46 = arith.addf %45, %44 : vector<1x128xf32>
    %47 = arith.divf %45, %46 : vector<1x128xf32>
    %c2_i32 = arith.constant 2 : i32
    %48 = vector.broadcast %c2_i32 : i32 to vector<1x128xi32>
    %49 = arith.cmpi eq, %38, %48 : vector<1x128xi32>
    %cst_10 = arith.constant 0.000000e+00 : f32
    %50 = vector.broadcast %cst_10 : f32 to vector<1x128xf32>
    %51 = arith.subf %50, %37 : vector<1x128xf32>
    %cst_11 = arith.constant 0.000000e+00 : f32
    %52 = vector.broadcast %cst_11 : f32 to vector<1x128xf32>
    %53 = arith.subf %52, %51 : vector<1x128xf32>
    %cst_12 = arith.constant 0.000000e+00 : f32
    %54 = vector.broadcast %cst_12 : f32 to vector<1x128xf32>
    %55 = arith.maximumf %53, %54 : vector<1x128xf32>
    %56 = vector.broadcast %cst_12 : f32 to vector<1x128xf32>
    %57 = arith.subf %53, %56 : vector<1x128xf32>
    %58 = arith.cmpf one, %57, %57 : vector<1x128xf32>
    %59 = vector.broadcast %cst_12 : f32 to vector<1x128xf32>
    %60 = arith.addf %53, %59 : vector<1x128xf32>
    %61 = math.absf %57 : vector<1x128xf32>
    %cst_13 = arith.constant 0.000000e+00 : f32
    %62 = vector.broadcast %cst_13 : f32 to vector<1x128xf32>
    %63 = arith.subf %62, %61 : vector<1x128xf32>
    %64 = math.exp %63 : vector<1x128xf32>
    %65 = math.log1p %64 : vector<1x128xf32>
    %66 = arith.addf %55, %65 : vector<1x128xf32>
    %67 = arith.select %58, %60, %66 : vector<1x128xi1>, vector<1x128xf32>
    %cst_14 = arith.constant 0.000000e+00 : f32
    %68 = vector.broadcast %cst_14 : f32 to vector<1x128xf32>
    %69 = arith.subf %68, %67 : vector<1x128xf32>
    %cst_15 = arith.constant 0.000000e+00 : f32
    %70 = vector.broadcast %cst_15 : f32 to vector<1x128xf32>
    %71 = arith.subf %70, %37 : vector<1x128xf32>
    %cst_16 = arith.constant 0.000000e+00 : f32
    %72 = vector.broadcast %cst_16 : f32 to vector<1x128xf32>
    %73 = arith.maximumf %71, %72 : vector<1x128xf32>
    %74 = vector.broadcast %cst_16 : f32 to vector<1x128xf32>
    %75 = arith.subf %71, %74 : vector<1x128xf32>
    %76 = arith.cmpf one, %75, %75 : vector<1x128xf32>
    %77 = vector.broadcast %cst_16 : f32 to vector<1x128xf32>
    %78 = arith.addf %71, %77 : vector<1x128xf32>
    %79 = math.absf %75 : vector<1x128xf32>
    %cst_17 = arith.constant 0.000000e+00 : f32
    %80 = vector.broadcast %cst_17 : f32 to vector<1x128xf32>
    %81 = arith.subf %80, %79 : vector<1x128xf32>
    %82 = math.exp %81 : vector<1x128xf32>
    %83 = math.log1p %82 : vector<1x128xf32>
    %84 = arith.addf %73, %83 : vector<1x128xf32>
    %85 = arith.select %76, %78, %84 : vector<1x128xi1>, vector<1x128xf32>
    %cst_18 = arith.constant 0.000000e+00 : f32
    %86 = vector.broadcast %cst_18 : f32 to vector<1x128xf32>
    %87 = arith.subf %86, %85 : vector<1x128xf32>
    %88 = arith.select %49, %69, %87 : vector<1x128xi1>, vector<1x128xf32>
    %89 = arith.select %42, %47, %88 : vector<1x128xi1>, vector<1x128xf32>
    %90 = arith.select %40, %37, %89 : vector<1x128xi1>, vector<1x128xf32>
    %c0_19 = arith.constant 0 : index
    %c0_20 = arith.constant 0 : index
    %c0_21 = arith.constant 0 : index
    %91 = vector.load %arg4[%c0_19, %c0_20, %c0_21] : memref<1x1x128xf32, #tpu.memory_space<vmem>>, vector<1x1x128xf32>
    %92 = vector.shape_cast %91 : vector<1x1x128xf32> to vector<1x128xf32>
    %93 = vector.shape_cast %90 : vector<1x128xf32> to vector<1x1x128xf32>
    tpu.vector_store %arg4[%c0_19, %c0_20, %c0_21], %93 {strides = array<i32>} : memref<1x1x128xf32, #tpu.memory_space<vmem>>, vector<1x1x128xf32>,
    return
  }
  func.func @transform_0(%arg0: i32) -> (i32, i32, i32) {
    %c0_i32 = arith.constant 0 : i32
    %c0_i32_0 = arith.constant 0 : i32
    %c0_i32_1 = arith.constant 0 : i32
    return %arg0, %c0_i32, %c0_i32_0 : i32, i32, i32
  }
  func.func @transform_1(%arg0: i32) -> (i32, i32) {
    %c0_i32 = arith.constant 0 : i32
    %c0_i32_0 = arith.constant 0 : i32
    %c0_i32_1 = arith.constant 0 : i32
    return %c0_i32, %c0_i32_0 : i32, i32
  }
  func.func @transform_2(%arg0: i32) -> i32 {
    %c0_i32 = arith.constant 0 : i32
    %c0_i32_0 = arith.constant 0 : i32
    return %c0_i32 : i32
  }
  func.func @transform_3(%arg0: i32) -> (i32, i32, i32) {
    %c0_i32 = arith.constant 0 : i32
    %c0_i32_0 = arith.constant 0 : i32
    %c0_i32_1 = arith.constant 0 : i32
    return %arg0, %c0_i32, %c0_i32_0 : i32, i32, i32
  }
}

</mosaic_0001>

<llo_original>
// kernel: tpu_custom_call.1
$region0: #{tpu_custom_call.1}
  #allocation0 [shape = 'u32[]', space=smem, size = 0x4, offset = 0x4, fixed_abs, tag = 'smem constant byte address 0x4 - core index']
  #allocation1 [shape = 'u32[144,128]{1,0:T(1,128)}', space=vmem, size = 0x12000, scoped, tag = 'internal scratch']
  %s0 = inlined_call_operand.hbm [shape: f32[1,8,16], index: 0, kind: input, shape index: {}]
  %s1 = inlined_call_operand.hbm [shape: f32[8,16], index: 1, kind: input, shape index: {}]
  %s2 = inlined_call_operand.vmem [shape: f32[3], index: 2, kind: input, shape index: {}]
  %s3 = inlined_call_operand.hbm [shape: f32[1,1,128], index: 3, kind: output, shape index: {}]
  %s4 = sld [smem:[#allocation0]]
  $region34: #{tpu_custom_call.1} parent=0
    _
  %s6 = ssub.s32 1, %s4
  %s7 = scalar_select 0, %s6, %s4
  $region1: #{tpu_custom_call.1} parent=0
    #allocation2 [shape = 'u8[4096]{0}', space=vmem, size = 0x1000, scoped, tag = 'input window, operand 0, single buffered']
    #allocation3 [shape = 's32[1]{0}', space=sflag, size = 0x4, scoped, tag = 'scoped memory for tpu_custom_call.1']
    #allocation4 [shape = 's32[1]{0}', space=sflag, size = 0x4, scoped, tag = 'scoped memory for tpu_custom_call.1']
    #allocation5 [shape = 's32[1]{0}', space=sflag, size = 0x4, scoped, tag = 'scoped memory for tpu_custom_call.1']
    #allocation6 [shape = 'u8[4096]{0}', space=vmem, size = 0x1000, scoped, tag = 'input window, operand 1, single buffered']
    #allocation7 [shape = 's32[1]{0}', space=sflag, size = 0x4, scoped, tag = 'scoped memory for tpu_custom_call.1']
    #allocation8 [shape = 'u8[512]{0}', space=smem, size = 0x200, scoped, tag = 'input window, operand 2, single buffered']
    #allocation9 [shape = 'u8[512]{0}', space=vmem, size = 0x400, scoped, tag = 'output window, operand 0, single buffered']
    %8 = vsyncpa [#allocation3], 0
    %9 = vsyncpa [#allocation7], 0
    %10 = vsyncpa [#allocation5], 0
    %11 = vsyncpa [#allocation4], 0
    // Predicated region
    $region2: #{tpu_custom_call.1} parent=1 // pred_check
      _
    $region3: #{tpu_custom_call.1} parent=1 // pred_check_branch
      %13 = sbr.rel (0) target = $region5
    $region4: #{tpu_custom_call.1} parent=1 // pred_region
      %s15 = ssub.s32 128, 128
      %16 = vsyncadd [#allocation3], %s15
      %s18 = sshll.u32 [#allocation2], 4
      %s19 = int_to_ptr.vmem [resolvable:$true] %s18
      %21 = dma.hbm_to_vmem [thread:$0]  %s0, 128, %s19, [#allocation3]
    $region5: #{tpu_custom_call.1} parent=1 // pred_fallthru
      _
    // Predicated region
    $region6: #{tpu_custom_call.1} parent=1 // pred_check
      _
    $region7: #{tpu_custom_call.1} parent=1 // pred_check_branch
      %23 = sbr.rel (0) target = $region9
    $region8: #{tpu_custom_call.1} parent=1 // pred_region
      %s25 = ssub.s32 128, 128
      %26 = vsyncadd [#allocation7], %s25
      %s28 = sshll.u32 [#allocation6], 4
      %s29 = int_to_ptr.vmem [resolvable:$true] %s28
      %31 = dma.hbm_to_vmem [thread:$0]  %s1, 128, %s29, [#allocation7]
    $region9: #{tpu_custom_call.1} parent=1 // pred_fallthru
      _
    // Predicated region
    $region10: #{tpu_custom_call.1} parent=1 // pred_check
      _
    $region11: #{tpu_custom_call.1} parent=1 // pred_check_branch
      %33 = sbr.rel (0) target = $region13
    $region12: #{tpu_custom_call.1} parent=1 // pred_region
      %s35 = ssub.s32 16, 16
      %36 = vsyncadd [#allocation5], %s35
      %s38 = sshll.u32 %s2, 4
      %s39 = int_to_ptr.vmem [resolvable:$true] %s38
      %41 = dma.vmem_to_smem %s39, 16, [#allocation8], [#allocation5]
    $region13: #{tpu_custom_call.1} parent=1 // pred_fallthru
      _
    // Predicated region
    $region14: #{tpu_custom_call.1} parent=1 // pred_check
      _
    $region15: #{tpu_custom_call.1} parent=1 // pred_check_branch
      %43 = sbr.rel (0) target = $region17
    $region16: #{tpu_custom_call.1} parent=1 // pred_region
      %44 = dma.done [#allocation3], 128
    $region17: #{tpu_custom_call.1} parent=1 // pred_fallthru
      _
    // Predicated region
    $region18: #{tpu_custom_call.1} parent=1 // pred_check
      _
    $region19: #{tpu_custom_call.1} parent=1 // pred_check_branch
      %46 = sbr.rel (0) target = $region21
    $region20: #{tpu_custom_call.1} parent=1 // pred_region
      %47 = dma.done [#allocation7], 128
    $region21: #{tpu_custom_call.1} parent=1 // pred_fallthru
      _
    // Predicated region
    $region22: #{tpu_custom_call.1} parent=1 // pred_check
      _
    $region23: #{tpu_custom_call.1} parent=1 // pred_check_branch
      %49 = sbr.rel (0) target = $region25
    $region24: #{tpu_custom_call.1} parent=1 // pred_region
      %50 = dma.done [#allocation5], 16
    $region25: #{tpu_custom_call.1} parent=1 // pred_fallthru
      _
    %51 = sfence
    %v52 = vld [vmem:[#allocation2] sm:$0xff]
    %v53 = vld [vmem:[#allocation6] sm:$0xff]
    %s54 = sld [smem:[#allocation8]]
    %s55 = sld [smem:[#allocation8 + $0x1]]
    %s56 = sld [smem:[#allocation8 + $0x2]]
    %v57 = vlaneseq
    %v58 = vshrl.u32 %v57, 7
    %v59 = vsub.s32 0, %v58
    %v60 = vrot.slane %v53, %v59
    %v61 = vmul.f32 %v52, %v60
    %vm62 = vcmask 130048
    %v63 = vsel %vm62, %v61, 0.0
    %64 = vadd.xlane.f32.xlu0 %v63
    %v65 = vpop.xlane.xlu0 %64
    %v66 = vstv %s54
    %v67 = vadd.f32 %v65, %v66
    %v68 = vxor.u32 %v67, 2147483648
    %v69 = vmul.f32 %v68, 1.442695
    %v70 = vpow.pop %v69
    %v71 = vadd.f32 %v70, 1.0
    %v72 = vrcp.pop %v71
    %v73 = vmul.f32 1.0, %v72
    %v74 = vlaneseq
    %v75 = vshrl.u32 %v74, 7
    %v76 = vsub.s32 1, %v75
    %v77 = vrot.slane %v53, %v76
    %v78 = vmul.f32 %v52, %v77
    %v79 = vsel %vm62, %v78, 0.0
    %80 = vadd.xlane.f32.xlu0 %v79
    %v81 = vpop.xlane.xlu0 %80
    %v82 = vstv %s55
    %v83 = vadd.f32 %v81, %v82
    %v84 = vmul.f32 %v73, %v83
    %v85 = vrot.slane %v84, 4
    %v86 = vadd.f32 %v84, %v85
    %v87 = vrot.slane %v86, 2
    %v88 = vadd.f32 %v86, %v87
    %v89 = vrot.slane %v88, 1
    %v90 = vadd.f32 %v88, %v89
    %v92 = vrot.slane %v53, 3
    %v94 = vmul.f32 %v52, %v92
    %vm95 = vcmask 130055
    %v96 = vsel %vm95, %v94, 0.0
    %97 = vadd.xlane.f32.xlu0 %v96
    %v98 = vpop.xlane.xlu0 %97
    %v99 = vadd.f32 %v90, %v98
    %v100 = vstv %s56
    %v101 = vadd.f32 %v99, %v100
    %v102 = vlaneseq
    %v103 = vand.u32 %v102, 127
    %vm104 = vcmp.eq.s32.totalorder %v103, 0
    %vm105 = vcmp.eq.s32.totalorder %v103, 1
    %v106 = vxor.u32 %v101, 2147483648
    %v107 = vmul.f32 %v106, 1.442695
    %v108 = vpow.pop %v107
    %v109 = vadd.f32 %v108, 1.0
    %v110 = vrcp.pop %v109
    %v111 = vmul.f32 1.0, %v110
    %vm112 = vcmp.eq.s32.totalorder %v103, 2
    %v113 = vsub.f32 0.0, %v101
    %v114 = vsub.f32 0.0, %v113
    %v115 = vmax.f32 %v114, 0.0
    %vm116 = vcmp.ne.f32.partialorder %v114, %v114
    %v117 = vadd.f32 %v114, 0.0
    %v118 = vand.u32 2147483647, %v114
    %v119 = vsub.f32 0.0, %v118
    %v120 = vmul.f32 %v119, 1.442695
    %v121 = vpow.pop %v120
    %v122 = vadd.f32 %v121, 1.0
    %v123 = vlog2.pop %v122
    %v124 = vmul.f32 %v123, 0.6931472
    %v125 = vmul.f32 -0.5, %v121
    %v126 = vadd.f32 %v125, 1.0
    %v127 = vmul.f32 %v126, %v121
    %v128 = vand.u32 2147483647, %v121
    %vm129 = vcmp.lt.f32.partialorder %v128, 0.0004427343
    %v130 = vsel %vm129, %v127, %v124
    %v131 = vadd.f32 %v115, %v130
    %v132 = vsel %vm116, %v117, %v131
    %v133 = vsub.f32 0.0, %v132
    %v134 = vmax.f32 %v113, 0.0
    %vm135 = vcmp.ne.f32.partialorder %v113, %v113
    %v136 = vadd.f32 %v113, 0.0
    %v137 = vand.u32 2147483647, %v113
    %v138 = vsub.f32 0.0, %v137
    %v139 = vmul.f32 %v138, 1.442695
    %v140 = vpow.pop %v139
    %v141 = vadd.f32 %v140, 1.0
    %v142 = vlog2.pop %v141
    %v143 = vmul.f32 %v142, 0.6931472
    %v144 = vmul.f32 -0.5, %v140
    %v145 = vadd.f32 %v144, 1.0
    %v146 = vmul.f32 %v145, %v140
    %v147 = vand.u32 2147483647, %v140
    %vm148 = vcmp.lt.f32.partialorder %v147, 0.0004427343
    %v149 = vsel %vm148, %v146, %v143
    %v150 = vadd.f32 %v134, %v149
    %v151 = vsel %vm135, %v136, %v150
    %v152 = vsub.f32 0.0, %v151
    %v153 = vsel %vm112, %v133, %v152
    %v154 = vsel %vm105, %v111, %v153
    %v155 = vsel %vm104, %v101, %v154
    %156 = vst [vmem:[#allocation9 - $0x7] sm:$0x80] %v155
    // Predicated region
    $region26: #{tpu_custom_call.1} parent=1 // pred_check
      _
    $region27: #{tpu_custom_call.1} parent=1 // pred_check_branch
      %158 = sbr.rel (0) target = $region29
    $region28: #{tpu_custom_call.1} parent=1 // pred_region
      %s160 = ssub.s32 16, 16
      %161 = vsyncadd [#allocation4], %s160
      %s163 = sshll.u32 [#allocation9], 4
      %s164 = int_to_ptr.vmem [resolvable:$true] %s163
      %166 = dma.vmem_to_hbm [thread:$0]  %s164, 16, %s3, [#allocation4]
    $region29: #{tpu_custom_call.1} parent=1 // pred_fallthru
      _
    // Predicated region
    $region30: #{tpu_custom_call.1} parent=1 // pred_check
      _
    $region31: #{tpu_custom_call.1} parent=1 // pred_check_branch
      %168 = sbr.rel (0) target = $region33
    $region32: #{tpu_custom_call.1} parent=1 // pred_region
      %169 = dma.done [#allocation4], 16
    $region33: #{tpu_custom_call.1} parent=1 // pred_fallthru
      _
    %170 = vsyncpa [#allocation3], 1
    %171 = vsyncpa [#allocation7], 1
    %172 = vsyncpa [#allocation4], 1
    %173 = vsyncpa [#allocation5], 1

</llo_original>
